<compile_context>
chip_gen: v7x
topology: tpu7x:2x2x1
jax: 0.10.0
libtpu: 0.0.40
codegen_flags: <defaults>
</compile_context>

<pallas_src>
import functools

import jax
import jax.numpy as jnp
from jax.experimental import pallas as pl
from jax.experimental.pallas import tpu as pltpu


def _logits_softmax_kernel(xt_ref, w1_ref, b1_ref, w2_ref, b2_ref, out_ref):
    """Fused logits model (2-layer MLP) + stable softmax, batch on the lane axis.

    xt_ref : (D, TM)  input tile, transposed (batch on the 128-wide lane axis)
    w1_ref : (H, D)   hidden-layer weight (nn.Linear layout; VMEM-resident)
    b1_ref : (H, 1)   hidden-layer bias (column vector -> lane broadcast)
    w2_ref : (C, H)   output-layer weight
    b2_ref : (C, 1)   output-layer bias
    out_ref: (C, TM)  per-class probabilities, transposed (lane-dense last dim)
    """
    # Hidden layer on the MXU (f32 accumulation); ELU on VPU/EUP.
    h = jnp.dot(w1_ref[...], xt_ref[...], preferred_element_type=jnp.float32)
    h = h + b1_ref[...]
    # ELU(alpha=1).  exp(x)-1 is only evaluated on the x<=0 branch where its absolute
    # error is <= 2^-24, so the expm1 refinement is numerically irrelevant here.
    h = jnp.where(h > 0.0, h, jnp.exp(h) - 1.0)

    # Output logits on the MXU.
    logits = jnp.dot(w2_ref[...], h, preferred_element_type=jnp.float32)
    logits = logits + b2_ref[...]

    # Numerically stable softmax over the class (sublane) axis.
    m = jnp.max(logits, axis=0, keepdims=True)
    e = jnp.exp(logits - m)
    s = jnp.sum(e, axis=0, keepdims=True)
    r = pl.reciprocal(s, approx=True)      # EUP vrcp (otherwise-idle slot)
    r = r * (2.0 - s * r)                  # one Newton step -> ~f32-accurate 1/s
    out_ref[...] = (e * r).astype(out_ref.dtype)


def _round_up(a: int, b: int) -> int:
    return ((a + b - 1) // b) * b


@functools.partial(jax.jit, static_argnames=("block_cols",))
def logits_to_predicate(x, l, w1, b1, w2, b2, *, block_cols=4096):
    """Forward pass of LogitsToPredicate: softmax(logits_model(x), axis=1).

    `l` is accepted for API parity with the PyTorch module but is unused -- the
    reference forward returns the full probability matrix.

    Parameter layout follows torch.nn.Linear: w1 (H, D), b1 (H,), w2 (C, H), b2 (C,).
    """
    del l  # unused by the reference forward
    n, d = x.shape
    h = w1.shape[0]
    c = w2.shape[0]

    # Batch tile on the lane axis: must be a multiple of 128 or the full batch
    # extent.  Once N > 256, force >= 2 grid steps so the "parallel" annotation
    # actually shards the batch across both v7x TensorCores.
    block_cols = max(128, _round_up(block_cols, 128))
    if n <= 256:
        tm = n
    else:
        tm = min(block_cols, _round_up(pl.cdiv(n, 2), 128))
    grid = (pl.cdiv(n, tm),)

    itemsize = lambda a: jnp.dtype(a.dtype).itemsize
    cost = pl.CostEstimate(
        flops=2 * n * (d * h + h * c),
        transcendentals=n * (h + c + 1),   # ELU exp + softmax exp + vrcp
        bytes_accessed=(x.size * itemsize(x)
                        + w1.size * itemsize(w1) + b1.size * itemsize(b1)
                        + w2.size * itemsize(w2) + b2.size * itemsize(b2)
                        + n * c * 4),
    )

    probs_t = pl.pallas_call(
        _logits_softmax_kernel,
        out_shape=jax.ShapeDtypeStruct((c, n), jnp.float32),
        grid_spec=pltpu.PrefetchScalarGridSpec(
            num_scalar_prefetch=0,
            grid=grid,
            in_specs=[
                pl.BlockSpec((d, tm), lambda i: (0, i)),   # x^T, batch tiled on lanes
                pl.BlockSpec((h, d), lambda i: (0, 0)),    # weights VMEM-resident
                pl.BlockSpec((h, 1), lambda i: (0, 0)),
                pl.BlockSpec((c, h), lambda i: (0, 0)),
                pl.BlockSpec((c, 1), lambda i: (0, 0)),
            ],
            out_specs=pl.BlockSpec((c, tm), lambda i: (0, i)),
        ),
        compiler_params=pltpu.CompilerParams(
            dimension_semantics=("parallel",),             # dual-TC sharding on v7x
        ),
        cost_estimate=cost,
    )(
        x.T,                 # layout plumbing only; NO dtype cast (native dtype in)
        w1,
        b1.reshape(h, 1),
        w2,
        b2.reshape(c, 1),
    )
    # The module's forward returns (N, C); transpose back (cheap layout plumbing).
    return probs_t.T


if __name__ == "__main__":
    key = jax.random.PRNGKey(0)
    kx, kl, k1, k2, k3, k4 = jax.random.split(key, 6)

    N, D, H, C = 16, 8, 32, 10   # batch, features, hidden, classes

    x = jax.random.normal(kx, (N, D), dtype=jnp.float32)
    # One-hot class labels: accepted but unused by the reference forward.
    l = jax.nn.one_hot(jax.random.randint(kl, (N,), 0, C), C, dtype=jnp.float32)

    # Deterministic stand-in logits-model parameters (torch.nn.Linear layout).
    # TODO(synk): the PyTorch module wraps an arbitrary external logits_model; a
    # 2-layer MLP with in-script deterministic weights stands in for it here.
    w1 = jax.random.normal(k1, (H, D), dtype=jnp.float32) / jnp.sqrt(D)
    b1 = jax.random.normal(k2, (H,), dtype=jnp.float32) * 0.01
    w2 = jax.random.normal(k3, (C, H), dtype=jnp.float32) / jnp.sqrt(H)
    b2 = jax.random.normal(k4, (C,), dtype=jnp.float32) * 0.01

    probs = logits_to_predicate(x, l, w1, b1, w2, b2)
    probs = jax.block_until_ready(probs)

    # Plain-JAX reference: softmax(MLP(x), axis=1).
    h_ref = x @ w1.T + b1
    h_ref = jnp.where(h_ref > 0.0, h_ref, jnp.exp(h_ref) - 1.0)
    ref = jax.nn.softmax(h_ref @ w2.T + b2, axis=1)

    assert probs.shape == (N, C)
    assert probs.dtype == jnp.float32
    assert bool(jnp.all((probs >= 0.0) & (probs <= 1.0 + 1e-6)))
    assert bool(jnp.allclose(jnp.sum(probs, axis=1), 1.0, atol=1e-4))
    assert bool(jnp.allclose(probs, ref, atol=1e-2, rtol=1e-2))
    print("KERNEL_OK")
</pallas_src>

<mosaic_0001>
module attributes {stable_mosaic.version = 11 : i64} {
  func.func @_logits_softmax_kernel(%arg0: i32, %arg1: memref<8x16xf32, #tpu.memory_space<vmem>>, %arg2: memref<32x8xf32, #tpu.memory_space<vmem>>, %arg3: memref<32x1xf32, #tpu.memory_space<vmem>>, %arg4: memref<10x32xf32, #tpu.memory_space<vmem>>, %arg5: memref<10x1xf32, #tpu.memory_space<vmem>>, %arg6: memref<10x16xf32, #tpu.memory_space<vmem>>) attributes {dimension_semantics = [#tpu.dimension_semantics<parallel>], iteration_bounds = array<i64: 1>, scalar_prefetch = 0 : i64, scratch_operands = 0 : i64, tpu.core_type = #tpu.core_type<tc>, window_params = [{transform_indices = @transform_0, window_bounds = array<i64: 8, 16>}, {pipeline_mode = #tpu.pipeline_mode<synchronous>, transform_indices = @transform_1, window_bounds = array<i64: 32, 8>}, {pipeline_mode = #tpu.pipeline_mode<synchronous>, transform_indices = @transform_2, window_bounds = array<i64: 32, 1>}, {pipeline_mode = #tpu.pipeline_mode<synchronous>, transform_indices = @transform_3, window_bounds = array<i64: 10, 32>}, {pipeline_mode = #tpu.pipeline_mode<synchronous>, transform_indices = @transform_4, window_bounds = array<i64: 10, 1>}, {transform_indices = @transform_5, window_bounds = array<i64: 10, 16>}]} {
    %c0 = arith.constant 0 : index
    %c0_0 = arith.constant 0 : index
    %0 = vector.load %arg2[%c0, %c0_0] : memref<32x8xf32, #tpu.memory_space<vmem>>, vector<32x8xf32>
    %c0_1 = arith.constant 0 : index
    %c0_2 = arith.constant 0 : index
    %1 = vector.load %arg1[%c0_1, %c0_2] : memref<8x16xf32, #tpu.memory_space<vmem>>, vector<8x16xf32>
    %cst = arith.constant dense<0.000000e+00> : vector<32x16xf32>
    %2 = tpu.matmul %0, %1, %cst {dimension_numbers = #tpu.dot_dimension_numbers<[1], [0], [0], [1], [0, 0, 1, 1], [], []>} : vector<32x8xf32>, vector<8x16xf32>, vector<32x16xf32> -> vector<32x16xf32>
    %c0_3 = arith.constant 0 : index
    %c0_4 = arith.constant 0 : index
    %3 = vector.load %arg3[%c0_3, %c0_4] : memref<32x1xf32, #tpu.memory_space<vmem>>, vector<32x1xf32>
    %4 = vector.broadcast %3 : vector<32x1xf32> to vector<32x16xf32>
    %5 = arith.addf %2, %4 : vector<32x16xf32>
    %cst_5 = arith.constant 0.000000e+00 : f32
    %6 = vector.broadcast %cst_5 : f32 to vector<32x16xf32>
    %7 = arith.cmpf ogt, %5, %6 : vector<32x16xf32>
    %8 = math.exp %5 : vector<32x16xf32>
    %cst_6 = arith.constant 1.000000e+00 : f32
    %9 = vector.broadcast %cst_6 : f32 to vector<32x16xf32>
    %10 = arith.subf %8, %9 : vector<32x16xf32>
    %11 = arith.select %7, %5, %10 : vector<32x16xi1>, vector<32x16xf32>
    %c0_7 = arith.constant 0 : index
    %c0_8 = arith.constant 0 : index
    %12 = vector.load %arg4[%c0_7, %c0_8] : memref<10x32xf32, #tpu.memory_space<vmem>>, vector<10x32xf32>
    %cst_9 = arith.constant dense<0.000000e+00> : vector<10x16xf32>
    %13 = tpu.matmul %12, %11, %cst_9 {dimension_numbers = #tpu.dot_dimension_numbers<[1], [0], [0], [1], [0, 0, 1, 1], [], []>} : vector<10x32xf32>, vector<32x16xf32>, vector<10x16xf32> -> vector<10x16xf32>
    %c0_10 = arith.constant 0 : index
    %c0_11 = arith.constant 0 : index
    %14 = vector.load %arg5[%c0_10, %c0_11] : memref<10x1xf32, #tpu.memory_space<vmem>>, vector<10x1xf32>
    %15 = vector.broadcast %14 : vector<10x1xf32> to vector<10x16xf32>
    %16 = arith.addf %13, %15 : vector<10x16xf32>
    %cst_12 = arith.constant dense<0xFF800000> : vector<16xf32>
    %17 = vector.multi_reduction <maximumf>, %16, %cst_12 [0] : vector<10x16xf32> to vector<16xf32>
    %18 = vector.shape_cast %17 : vector<16xf32> to vector<1x16xf32>
    %19 = vector.broadcast %18 : vector<1x16xf32> to vector<10x16xf32>
    %20 = arith.subf %16, %19 : vector<10x16xf32>
    %21 = math.exp %20 : vector<10x16xf32>
    %cst_13 = arith.constant dense<0.000000e+00> : vector<16xf32>
    %22 = vector.multi_reduction <add>, %21, %cst_13 [0] : vector<10x16xf32> to vector<16xf32>
    %23 = vector.shape_cast %22 : vector<16xf32> to vector<1x16xf32>
    %24 = tpu.reciprocal %23 {approx = true} : vector<1x16xf32> -> vector<1x16xf32>
    %25 = arith.mulf %23, %24 : vector<1x16xf32>
    %cst_14 = arith.constant 2.000000e+00 : f32
    %26 = vector.broadcast %cst_14 : f32 to vector<1x16xf32>
    %27 = arith.subf %26, %25 : vector<1x16xf32>
    %28 = arith.mulf %24, %27 : vector<1x16xf32>
    %29 = vector.broadcast %28 : vector<1x16xf32> to vector<10x16xf32>
    %30 = arith.mulf %21, %29 : vector<10x16xf32>
    %c0_15 = arith.constant 0 : index
    %c0_16 = arith.constant 0 : index
    %31 = vector.load %arg6[%c0_15, %c0_16] : memref<10x16xf32, #tpu.memory_space<vmem>>, vector<10x16xf32>
    tpu.vector_store %arg6[%c0_15, %c0_16], %30 {strides = array<i32>} : memref<10x16xf32, #tpu.memory_space<vmem>>, vector<10x16xf32>,
    return
  }
  func.func @transform_0(%arg0: i32) -> (i32, i32) {
    %c0_i32 = arith.constant 0 : i32
    %c0_i32_0 = arith.constant 0 : i32
    return %c0_i32, %arg0 : i32, i32
  }
  func.func @transform_1(%arg0: i32) -> (i32, i32) {
    %c0_i32 = arith.constant 0 : i32
    %c0_i32_0 = arith.constant 0 : i32
    %c0_i32_1 = arith.constant 0 : i32
    return %c0_i32, %c0_i32_0 : i32, i32
  }
  func.func @transform_2(%arg0: i32) -> (i32, i32) {
    %c0_i32 = arith.constant 0 : i32
    %c0_i32_0 = arith.constant 0 : i32
    %c0_i32_1 = arith.constant 0 : i32
    return %c0_i32, %c0_i32_0 : i32, i32
  }
  func.func @transform_3(%arg0: i32) -> (i32, i32) {
    %c0_i32 = arith.constant 0 : i32
    %c0_i32_0 = arith.constant 0 : i32
    %c0_i32_1 = arith.constant 0 : i32
    return %c0_i32, %c0_i32_0 : i32, i32
  }
  func.func @transform_4(%arg0: i32) -> (i32, i32) {
    %c0_i32 = arith.constant 0 : i32
    %c0_i32_0 = arith.constant 0 : i32
    %c0_i32_1 = arith.constant 0 : i32
    return %c0_i32, %c0_i32_0 : i32, i32
  }
  func.func @transform_5(%arg0: i32) -> (i32, i32) {
    %c0_i32 = arith.constant 0 : i32
    %c0_i32_0 = arith.constant 0 : i32
    return %c0_i32, %arg0 : i32, i32
  }
}

</mosaic_0001>

<llo_original>
// kernel: logits_to_predicate.1
$region0: #{logits_to_predicate.1}
  #allocation0 [shape = 'u32[]', space=smem, size = 0x4, offset = 0x4, fixed_abs, tag = 'smem constant byte address 0x4 - core index']
  #allocation1 [shape = 'u32[144,128]{1,0:T(1,128)}', space=vmem, size = 0x12000, scoped, tag = 'internal scratch']
  %s0 = inlined_call_operand.vmem [shape: f32[8,16], index: 0, kind: input, shape index: {}]
  %s1 = inlined_call_operand.vmem [shape: f32[32,8], index: 1, kind: input, shape index: {}]
  %s2 = inlined_call_operand.vmem [shape: f32[32,1], index: 2, kind: input, shape index: {}]
  %s3 = inlined_call_operand.vmem [shape: f32[10,32], index: 3, kind: input, shape index: {}]
  %s4 = inlined_call_operand.vmem [shape: f32[10,1], index: 4, kind: input, shape index: {}]
  %s5 = inlined_call_operand.vmem [shape: f32[10,16], index: 5, kind: output, shape index: {}]
  %s6 = sld [smem:[#allocation0]]
  $region30: #{logits_to_predicate.1} parent=0
    _
  %s8 = ssub.s32 1, %s6
  %s9 = scalar_select 0, %s8, %s6
  // Predicated region
  $region2: #{logits_to_predicate.1} parent=0 // pred_check
    _
  $region3: #{logits_to_predicate.1} parent=0 // pred_check_branch
    %11 = sbr.rel (0) target = $region5
  $region4: #{logits_to_predicate.1} parent=0 // pred_region
    _
  $region5: #{logits_to_predicate.1} parent=0 // pred_fallthru
    _
  // Predicated region
  $region6: #{logits_to_predicate.1} parent=0 // pred_check
    _
  $region7: #{logits_to_predicate.1} parent=0 // pred_check_branch
    %13 = sbr.rel (0) target = $region9
  $region8: #{logits_to_predicate.1} parent=0 // pred_region
    _
  $region9: #{logits_to_predicate.1} parent=0 // pred_fallthru
    _
  // Predicated region
  $region10: #{logits_to_predicate.1} parent=0 // pred_check
    _
  $region11: #{logits_to_predicate.1} parent=0 // pred_check_branch
    %15 = sbr.rel (0) target = $region13
  $region12: #{logits_to_predicate.1} parent=0 // pred_region
    _
  $region13: #{logits_to_predicate.1} parent=0 // pred_fallthru
    _
  // Predicated region
  $region14: #{logits_to_predicate.1} parent=0 // pred_check
    _
  $region15: #{logits_to_predicate.1} parent=0 // pred_check_branch
    %17 = sbr.rel (0) target = $region17
  $region16: #{logits_to_predicate.1} parent=0 // pred_region
    _
  $region17: #{logits_to_predicate.1} parent=0 // pred_fallthru
    _
  // Predicated region
  $region18: #{logits_to_predicate.1} parent=0 // pred_check
    _
  $region19: #{logits_to_predicate.1} parent=0 // pred_check_branch
    %19 = sbr.rel (0) target = $region21
  $region20: #{logits_to_predicate.1} parent=0 // pred_region
    _
  $region21: #{logits_to_predicate.1} parent=0 // pred_fallthru
    _
  %v20 = vld [vmem:[%s1] sm:$0xff]
  %v21 = vld [vmem:[%s1 + $0x8] sm:$0xff]
  %v22 = vld [vmem:[%s1 + $0x10] sm:$0xff]
  %v23 = vld [vmem:[%s1 + $0x18] sm:$0xff]
  %v24 = vld [vmem:[%s0] sm:$0xff]
  %v25 = vld [vmem:[%s2] sm:$0xff]
  %v26 = vld [vmem:[%s2 + $0x8] sm:$0xff]
  %v27 = vld [vmem:[%s2 + $0x10] sm:$0xff]
  %v28 = vld [vmem:[%s2 + $0x18] sm:$0xff]
  %30 = vset.pattern.permute.xlu0 0
  %31 = vperm.xlu0 %30, %v25
  %v32 = vpop.permute.xlu0 %31
  %35 = vset.pattern.permute.xlu0 0
  %36 = vperm.xlu0 %35, %v26
  %v37 = vpop.permute.xlu0 %36
  %40 = vset.pattern.permute.xlu0 0
  %41 = vperm.xlu0 %40, %v27
  %v42 = vpop.permute.xlu0 %41
  %45 = vset.pattern.permute.xlu0 0
  %46 = vperm.xlu0 %45, %v28
  %v47 = vpop.permute.xlu0 %46
  %vm49 = vcmask 64512
  %v51 = vsel %vm49, %v20, 0
  %v54 = vsel %vm49, %v21, 0
  %v57 = vsel %vm49, %v22, 0
  %v60 = vsel %vm49, %v23, 0
  %62 = vmatprep.subr.mxu0 0.0
  %63 = vmatpush1.msra.mxu0 %v24
  %64 = vmatprep.subr.mxu0 0.0
  %65 = vmatpush1.msra.mxu0 0.0
  %66 = vmatprep.subr.mxu0 0.0
  %67 = vmatpush1.msra.mxu0 0.0
  %68 = vmatprep.subr.mxu0 0.0
  %69 = vmatpush1.msra.mxu0 0.0
  %70 = vmatprep.subr.mxu0 0.0
  %71 = vmatpush1.msra.mxu0 0.0
  %72 = vmatprep.subr.mxu0 0.0
  %73 = vmatpush1.msra.mxu0 0.0
  %74 = vmatprep.subr.mxu0 0.0
  %75 = vmatpush1.msra.mxu0 0.0
  %76 = vmatprep.subr.mxu0 0.0
  %77 = vmatpush1.msra.mxu0 0.0
  %78 = vmatprep.subr.mxu0 0.0
  %79 = vmatpush1.msra.mxu0 0.0
  %80 = vmatprep.subr.mxu0 0.0
  %81 = vmatpush1.msra.mxu0 0.0
  %82 = vmatprep.subr.mxu0 0.0
  %83 = vmatpush1.msra.mxu0 0.0
  %84 = vmatprep.subr.mxu0 0.0
  %85 = vmatpush1.msra.mxu0 0.0
  %86 = vmatprep.subr.mxu0 0.0
  %87 = vmatpush1.msra.mxu0 0.0
  %88 = vmatprep.subr.mxu0 0.0
  %89 = vmatpush1.msra.mxu0 0.0
  %90 = vmatprep.subr.mxu0 0.0
  %91 = vmatpush1.msra.mxu0 0.0
  %92 = vmatprep.subr.mxu0 0.0
  %93 = vmatpush1.msra.mxu0 0.0
  %94 = vmatprep.subr.mxu0 0.0
  %95 = vmatpush1.msra.mxu0 0.0
  %96 = vmatprep.subr.mxu0 0.0
  %97 = vmatpush1.msra.mxu0 0.0
  %98 = vmatprep.subr.mxu0 0.0
  %99 = vmatpush1.msra.mxu0 0.0
  %100 = vmatprep.subr.mxu0 0.0
  %101 = vmatpush1.msra.mxu0 0.0
  %102 = vmatprep.subr.mxu0 0.0
  %103 = vmatpush1.msra.mxu0 0.0
  %104 = vmatprep.subr.mxu0 0.0
  %105 = vmatpush1.msra.mxu0 0.0
  %106 = vmatprep.subr.mxu0 0.0
  %107 = vmatpush1.msra.mxu0 0.0
  %108 = vmatprep.subr.mxu0 0.0
  %109 = vmatpush1.msra.mxu0 0.0
  %110 = vmatprep.subr.mxu0 0.0
  %111 = vmatpush1.msra.mxu0 0.0
  %112 = vmatprep.subr.mxu0 0.0
  %113 = vmatpush1.msra.mxu0 0.0
  %114 = vmatprep.subr.mxu0 0.0
  %115 = vmatpush1.msra.mxu0 0.0
  %116 = vmatprep.subr.mxu0 0.0
  %117 = vmatpush1.msra.mxu0 0.0
  %118 = vmatprep.subr.mxu0 0.0
  %119 = vmatpush1.msra.mxu0 0.0
  %120 = vmatprep.subr.mxu0 0.0
  %121 = vmatpush1.msra.mxu0 0.0
  %122 = vmatprep.subr.mxu0 0.0
  %123 = vmatpush1.msra.mxu0 0.0
  %124 = vmatprep.subr.mxu0 0.0
  %125 = vmatpush1.msra.mxu0 0.0
  %126 = vmatprep.mubr.f32.mxu0 0.0
  %127 = vmatmul.mubr.f32.gmra.mrb[0].mxu0 %v51
  %v128 = vpop.f32.mrb[0].mxu0
  %v129 = vadd.f32 %v32, %v128
  %v130 = vpop.f32.mrb[0].mxu0
  %131 = vmatprep.mubr.f32.mxu0 0.0
  %132 = vmatmul.mubr.f32.gmra.mrb[0].mxu0 %v54
  %v133 = vpop.f32.mrb[0].mxu0
  %v134 = vadd.f32 %v37, %v133
  %v135 = vpop.f32.mrb[0].mxu0
  %136 = vmatprep.mubr.f32.mxu0 0.0
  %137 = vmatmul.mubr.f32.gmra.mrb[0].mxu0 %v57
  %v138 = vpop.f32.mrb[0].mxu0
  %v139 = vadd.f32 %v42, %v138
  %v140 = vpop.f32.mrb[0].mxu0
  %141 = vmatprep.mubr.f32.mxu0 0.0
  %142 = vmatmul.mubr.f32.gmra.mrb[0].mxu0 %v60
  %v143 = vpop.f32.mrb[0].mxu0
  %v144 = vadd.f32 %v47, %v143
  %v145 = vpop.f32.mrb[0].mxu0
  %146 = vdwg.mxu0
  %vm147 = vcmp.gt.f32.partialorder %v129, 0.0
  %vm148 = vcmp.gt.f32.partialorder %v134, 0.0
  %vm149 = vcmp.gt.f32.partialorder %v139, 0.0
  %vm150 = vcmp.gt.f32.partialorder %v144, 0.0
  %v151 = vmul.f32 %v129, 1.442695
  %v152 = vpow.pop %v151
  %v153 = vmul.f32 %v134, 1.442695
  %v154 = vpow.pop %v153
  %v155 = vmul.f32 %v139, 1.442695
  %v156 = vpow.pop %v155
  %v157 = vmul.f32 %v144, 1.442695
  %v158 = vpow.pop %v157
  %v159 = vsub.f32 %v152, 1.0
  %v160 = vsub.f32 %v154, 1.0
  %v161 = vsub.f32 %v156, 1.0
  %v162 = vsub.f32 %v158, 1.0
  %v163 = vsel %vm147, %v129, %v159
  %v164 = vsel %vm148, %v134, %v160
  %v165 = vsel %vm149, %v139, %v161
  %v166 = vsel %vm150, %v144, %v162
  %v167 = vld [vmem:[%s3] sm:$0xff]
  %v168 = vld [vmem:[%s3 + $0x8] sm:$0x3]
  %v169 = vld [vmem:[%s4] sm:$0xff]
  %v170 = vld [vmem:[%s4 + $0x8] sm:$0x3]
  %172 = vset.pattern.permute.xlu0 0
  %173 = vperm.xlu0 %172, %v169
  %v174 = vpop.permute.xlu0 %173
  %177 = vset.pattern.permute.xlu0 0
  %178 = vperm.xlu0 %177, %v170
  %v179 = vpop.permute.xlu0 %178
  %vm181 = vcmask 261120
  %v183 = vsel %vm181, %v167, 0
  %v186 = vsel %vm181, %v168, 0
  %188 = vmatprep.subr.mxu0 0.0
  %189 = vmatpush1.msra.mxu0 %v163
  %190 = vmatprep.subr.mxu0 0.0
  %191 = vmatpush1.msra.mxu0 %v164
  %192 = vmatprep.subr.mxu0 0.0
  %193 = vmatpush1.msra.mxu0 %v165
  %194 = vmatprep.subr.mxu0 0.0
  %195 = vmatpush1.msra.mxu0 %v166
  %196 = vmatprep.subr.mxu0 0.0
  %197 = vmatpush1.msra.mxu0 0.0
  %198 = vmatprep.subr.mxu0 0.0
  %199 = vmatpush1.msra.mxu0 0.0
  %200 = vmatprep.subr.mxu0 0.0
  %201 = vmatpush1.msra.mxu0 0.0
  %202 = vmatprep.subr.mxu0 0.0
  %203 = vmatpush1.msra.mxu0 0.0
  %204 = vmatprep.subr.mxu0 0.0
  %205 = vmatpush1.msra.mxu0 0.0
  %206 = vmatprep.subr.mxu0 0.0
  %207 = vmatpush1.msra.mxu0 0.0
  %208 = vmatprep.subr.mxu0 0.0
  %209 = vmatpush1.msra.mxu0 0.0
  %210 = vmatprep.subr.mxu0 0.0
  %211 = vmatpush1.msra.mxu0 0.0
  %212 = vmatprep.subr.mxu0 0.0
  %213 = vmatpush1.msra.mxu0 0.0
  %214 = vmatprep.subr.mxu0 0.0
  %215 = vmatpush1.msra.mxu0 0.0
  %216 = vmatprep.subr.mxu0 0.0
  %217 = vmatpush1.msra.mxu0 0.0
  %218 = vmatprep.subr.mxu0 0.0
  %219 = vmatpush1.msra.mxu0 0.0
  %220 = vmatprep.subr.mxu0 0.0
  %221 = vmatpush1.msra.mxu0 0.0
  %222 = vmatprep.subr.mxu0 0.0
  %223 = vmatpush1.msra.mxu0 0.0
  %224 = vmatprep.subr.mxu0 0.0
  %225 = vmatpush1.msra.mxu0 0.0
  %226 = vmatprep.subr.mxu0 0.0
  %227 = vmatpush1.msra.mxu0 0.0
  %228 = vmatprep.subr.mxu0 0.0
  %229 = vmatpush1.msra.mxu0 0.0
  %230 = vmatprep.subr.mxu0 0.0
  %231 = vmatpush1.msra.mxu0 0.0
  %232 = vmatprep.subr.mxu0 0.0
  %233 = vmatpush1.msra.mxu0 0.0
  %234 = vmatprep.subr.mxu0 0.0
  %235 = vmatpush1.msra.mxu0 0.0
  %236 = vmatprep.subr.mxu0 0.0
  %237 = vmatpush1.msra.mxu0 0.0
  %238 = vmatprep.subr.mxu0 0.0
  %239 = vmatpush1.msra.mxu0 0.0
  %240 = vmatprep.subr.mxu0 0.0
  %241 = vmatpush1.msra.mxu0 0.0
  %242 = vmatprep.subr.mxu0 0.0
  %243 = vmatpush1.msra.mxu0 0.0
  %244 = vmatprep.subr.mxu0 0.0
  %245 = vmatpush1.msra.mxu0 0.0
  %246 = vmatprep.subr.mxu0 0.0
  %247 = vmatpush1.msra.mxu0 0.0
  %248 = vmatprep.subr.mxu0 0.0
  %249 = vmatpush1.msra.mxu0 0.0
  %250 = vmatprep.subr.mxu0 0.0
  %251 = vmatpush1.msra.mxu0 0.0
  %252 = vmatprep.mubr.f32.mxu0 0.0
  %253 = vmatmul.mubr.f32.gmra.mrb[0].mxu0 %v183
  %v254 = vpop.f32.mrb[0].mxu0
  %v255 = vadd.f32 %v174, %v254
  %v256 = vpop.f32.mrb[0].mxu0
  %257 = vmatprep.mubr.f32.mxu0 0.0
  %258 = vmatmul.mubr.f32.gmra.mrb[0].mxu0 %v186
  %v259 = vpop.f32.mrb[0].mxu0
  %v260 = vadd.f32 %v179, %v259
  %v261 = vpop.f32.mrb[0].mxu0
  %262 = vdwg.mxu0
  %vm263 = vcmask 130048
  %v264 = vsel %vm263, %v255, -inf
  %vm265 = vcmask 123904
  %v266 = vsel %vm265, %v260, -inf
  %v267 = vmax.f32 %v264, %v266
  %v268 = vrot.slane %v267, 4
  %v269 = vmax.f32 %v267, %v268
  %v270 = vrot.slane %v269, 2
  %v271 = vmax.f32 %v269, %v270
  %v272 = vrot.slane %v271, 1
  %v273 = vmax.f32 %v271, %v272
  %v274 = vsub.f32 %v255, %v273
  %v275 = vsub.f32 %v260, %v273
  %v276 = vmul.f32 %v274, 1.442695
  %v277 = vpow.pop %v276
  %v278 = vmul.f32 %v275, 1.442695
  %v279 = vpow.pop %v278
  %v280 = vsel %vm263, %v277, 0.0
  %v281 = vsel %vm265, %v279, 0.0
  %v282 = vadd.f32 %v280, %v281
  %v283 = vrot.slane %v282, 4
  %v284 = vadd.f32 %v282, %v283
  %v285 = vrot.slane %v284, 2
  %v286 = vadd.f32 %v284, %v285
  %v287 = vrot.slane %v286, 1
  %v288 = vadd.f32 %v286, %v287
  %v289 = vrcp.pop %v288
  %v290 = vmul.f32 %v288, %v289
  %v291 = vsub.f32 2.0, %v290
  %v292 = vmul.f32 %v289, %v291
  %v293 = vmul.f32 %v277, %v292
  %v294 = vmul.f32 %v279, %v292
  %295 = vst.msk [vmem:[%s5] sm:$0xff] %vm263, %v293
  %296 = vst.msk [vmem:[%s5 + $0x8] sm:$0x3] %vm265, %v294
  // Predicated region
  $region22: #{logits_to_predicate.1} parent=0 // pred_check
    _
  $region23: #{logits_to_predicate.1} parent=0 // pred_check_branch
    %298 = sbr.rel (0) target = $region25
  $region24: #{logits_to_predicate.1} parent=0 // pred_region
    _
  $region25: #{logits_to_predicate.1} parent=0 // pred_fallthru
    _
  // Predicated region
  $region26: #{logits_to_predicate.1} parent=0 // pred_check
    _
  $region27: #{logits_to_predicate.1} parent=0 // pred_check_branch
    %300 = sbr.rel (0) target = $region29
  $region28: #{logits_to_predicate.1} parent=0 // pred_region
    _
  $region29: #{logits_to_predicate.1} parent=0 // pred_fallthru
    _

</llo_original>
